<compile_context>
chip_gen: v7x
topology: tpu7x:2x2x1
jax: 0.10.0
libtpu: 0.0.40
codegen_flags: <defaults>
</compile_context>

<pallas_src>
import functools

import jax
import jax.numpy as jnp
from jax.experimental import pallas as pl
from jax.experimental.pallas import tpu as pltpu


def _round_up(x: int, m: int) -> int:
    return ((x + m - 1) // m) * m


def _sublane_multiple(dtype) -> int:
    # f32 -> 8, bf16/f16 -> 16, int8/fp8 -> 32 (packed sublane tiles).
    return max(8, 32 // jnp.dtype(dtype).itemsize)


# ---------------------------------------------------------------------------
# Kernels
# ---------------------------------------------------------------------------

def _linear_kernel_direct(x_ref, w_ref, b_ref, o_ref, *, mxu_dtype):
    """f32 output: accumulate straight into the resident output block."""
    k = pl.program_id(2)

    @pl.when(k == 0)
    def _():
        o_ref[...] = jnp.broadcast_to(
            b_ref[...].astype(o_ref.dtype), o_ref.shape
        )

    a = x_ref[...]
    w = w_ref[...]
    if mxu_dtype is not None:
        a = a.astype(mxu_dtype)
        w = w.astype(mxu_dtype)
    o_ref[...] += jnp.dot(a, w, preferred_element_type=jnp.float32)


def _linear_kernel_acc(x_ref, w_ref, b_ref, o_ref, acc_ref, *, mxu_dtype):
    """Low-precision output: f32 VMEM accumulator, single cast on the way out."""
    k = pl.program_id(2)

    @pl.when(k == 0)
    def _():
        acc_ref[...] = jnp.zeros_like(acc_ref)

    a = x_ref[...]
    w = w_ref[...]
    if mxu_dtype is not None:
        a = a.astype(mxu_dtype)
        w = w.astype(mxu_dtype)
    acc_ref[...] += jnp.dot(a, w, preferred_element_type=jnp.float32)

    @pl.when(k == pl.num_programs(2) - 1)
    def _():
        o_ref[...] = (
            acc_ref[...] + b_ref[...].astype(jnp.float32)
        ).astype(o_ref.dtype)


# ---------------------------------------------------------------------------
# Parameter pre-padding (do ONCE, outside the per-call hot path)
# ---------------------------------------------------------------------------

def prepare_linear_params(w, b, *, tn=512, tk=1024):
    """Pad torch-layout weight (Out, In) -> lane-aligned W.T and bias.

    Returns (w_t_padded, bias_padded, out_features). Doing this once means the
    per-forward-call path never spends HBM bandwidth re-padding the weight.
    """
    Out, In = w.shape
    Kp = _round_up(In, 128)
    Np = _round_up(Out, 128)
    tk = min(tk, Kp)
    tn = min(tn, Np)
    Kp = _round_up(Kp, tk)
    Np = _round_up(Np, tn)
    w_t = jnp.pad(jnp.asarray(w).T, ((0, Kp - In), (0, Np - Out)))
    b2 = jnp.pad(jnp.asarray(b).reshape(1, -1), ((0, 0), (0, Np - Out)))
    return w_t, b2, Out


# ---------------------------------------------------------------------------
# Forward
# ---------------------------------------------------------------------------

@functools.partial(
    jax.jit,
    static_argnames=(
        "out_features", "tm", "tn", "tk", "mxu_dtype",
        "vmem_limit_bytes", "w_buffers",
    ),
)
def lr_forward(
    x,
    w_t,
    b,
    *,
    out_features=None,
    tm=512,
    tn=512,
    tk=1024,
    mxu_dtype=None,                       # e.g. jnp.bfloat16 to use the bf16 MXU
    vmem_limit_bytes=48 * 1024 * 1024,    # v7x-safe; raise ~96 MiB on v5e/v6e
    w_buffers=2,                          # pl.Buffered depth for the weight stream
):
    """y = x @ w_t + b  (== torch.nn.Linear forward).

    x:   (B, In)
    w_t: (In, Out) torch weight transposed — may already be lane-padded (see
         prepare_linear_params); padding here is skipped when aligned.
    b:   (Out,) or (1, Out_padded)
    """
    B, In_x = x.shape
    K_w, N_w = w_t.shape
    assert In_x <= K_w, "x inner dim larger than weight inner dim"
    Out = out_features if out_features is not None else N_w

    b2 = b.reshape(1, -1)

    sub = _sublane_multiple(x.dtype)
    in_item = jnp.dtype(x.dtype).itemsize
    out_item = in_item                                  # output dtype == x.dtype
    use_acc = jnp.dtype(x.dtype) != jnp.dtype(jnp.float32)

    # ---- plan padded dims & clamp tiles (all static at trace time) --------
    Bp = _round_up(B, sub)
    Kp = _round_up(max(In_x, K_w), 128)
    Np = _round_up(N_w, 128)

    tm = min(tm, Bp)
    tk = min(tk, Kp)
    tn = min(tn, Np)
    Bp = _round_up(Bp, tm)
    Kp = _round_up(Kp, tk)
    Np = _round_up(Np, tn)

    # Keep the double-buffered working set inside a v7x-sized budget (64 MiB
    # physical per TC); shrink tk/tn while preserving 128-alignment and
    # divisibility of the padded dims.
    budget = min(vmem_limit_bytes, 40 * 1024 * 1024)

    def working_set(tm_, tn_, tk_):
        return (2 * tm_ * tk_ * in_item                 # x tiles
                + w_buffers * tk_ * tn_ * in_item       # weight tiles
                + 2 * tm_ * tn_ * out_item              # output tiles
                + (tm_ * tn_ * 4 if use_acc else 0)     # f32 accumulator
                + 2 * tn_ * in_item)                    # bias

    while working_set(tm, tn, tk) > budget and (tk % 256 == 0 or tn % 256 == 0):
        if tk >= tn and tk % 256 == 0:
            tk //= 2
        elif tn % 256 == 0:
            tn //= 2
        else:
            tk //= 2

    # Give both v7x TensorCores work when the M/N grid would otherwise be 1x1.
    if (Bp // tm) * (Np // tn) == 1 and Np % 256 == 0:
        tn = Np // 2

    # ---- pad only what is actually unaligned (no-op for pre-padded params) -
    xp = x if (Bp == B and Kp == In_x) else jnp.pad(
        x, ((0, Bp - B), (0, Kp - In_x)))
    wp = w_t if (Kp == K_w and Np == N_w) else jnp.pad(
        w_t, ((0, Kp - K_w), (0, Np - N_w)))
    bp = b2 if b2.shape[1] == Np else jnp.pad(
        b2, ((0, 0), (0, Np - b2.shape[1])))

    grid = (Bp // tm, Np // tn, Kp // tk)

    # Honest cost accounting: W is re-streamed once per M tile, x once per
    # N tile (each index_map is independent of the other parallel axis).
    cost = pl.CostEstimate(
        flops=2 * Bp * Kp * Np,
        transcendentals=0,
        bytes_accessed=(
            Bp * Kp * in_item * (Np // tn)      # x, streamed per N tile
            + Kp * Np * in_item * (Bp // tm)    # W.T, streamed per M tile
            + Np * in_item * (Bp // tm)         # bias
            + Bp * Np * out_item                # y
        ),
    )

    if w_buffers > 2:
        w_spec = pl.BlockSpec((tk, tn), lambda i, j, k: (k, j),
                              pipeline_mode=pl.Buffered(w_buffers))
    else:
        w_spec = pl.BlockSpec((tk, tn), lambda i, j, k: (k, j))

    if use_acc:
        kernel = functools.partial(_linear_kernel_acc, mxu_dtype=mxu_dtype)
        scratch = [pltpu.VMEM((tm, tn), jnp.float32)]
    else:
        kernel = functools.partial(_linear_kernel_direct, mxu_dtype=mxu_dtype)
        scratch = []

    out = pl.pallas_call(
        kernel,
        out_shape=jax.ShapeDtypeStruct((Bp, Np), x.dtype),
        grid_spec=pltpu.PrefetchScalarGridSpec(
            num_scalar_prefetch=0,
            grid=grid,
            in_specs=[
                pl.BlockSpec((tm, tk), lambda i, j, k: (i, k)),   # x tile
                w_spec,                                           # W.T tile
                pl.BlockSpec((1, tn), lambda i, j, k: (0, j)),    # bias tile
            ],
            out_specs=pl.BlockSpec((tm, tn), lambda i, j, k: (i, j)),
            scratch_shapes=scratch,
        ),
        compiler_params=pltpu.CompilerParams(
            dimension_semantics=("parallel", "parallel", "arbitrary"),
            vmem_limit_bytes=vmem_limit_bytes,
        ),
        cost_estimate=cost,
    )(xp, wp, bp)

    if Bp == B and Np == Out:
        return out
    return out[:B, :Out]


if __name__ == "__main__":
    # Deterministic parameter init (mimics nn.Linear(inputs, outputs) shapes).
    inputs, outputs, batch = 32, 16, 8
    key = jax.random.PRNGKey(0)
    kx, kw, kb = jax.random.split(key, 3)

    x = jax.random.normal(kx, (batch, inputs), dtype=jnp.float32)
    # PyTorch stores weight as (outputs, inputs).
    w = jax.random.normal(kw, (outputs, inputs), dtype=jnp.float32) * 0.1
    b = jax.random.normal(kb, (outputs,), dtype=jnp.float32) * 0.1

    # Pre-pad parameters ONCE, outside the per-call hot path.
    w_t_pad, b_pad, out_features = prepare_linear_params(w, b)

    # Exact (f32 MXU) path.
    y = lr_forward(x, w_t_pad, b_pad, out_features=out_features)
    y = jax.block_until_ready(y)

    y_ref = x @ w.T + b
    assert y.shape == (batch, outputs)
    assert jnp.allclose(y, y_ref, atol=1e-5, rtol=1e-5)

    # Optional bf16-MXU path (f32 accumulation) — looser tolerance.
    y_bf16 = jax.block_until_ready(
        lr_forward(x, w_t_pad, b_pad, out_features=out_features,
                   mxu_dtype=jnp.bfloat16))
    assert jnp.allclose(y_bf16, y_ref, atol=5e-2, rtol=5e-2)

    print("KERNEL_OK")
</pallas_src>

<mosaic_0001>
module attributes {stable_mosaic.version = 11 : i64} {
  func.func @_linear_kernel_direct(%arg0: i32, %arg1: i32, %arg2: i32, %arg3: memref<8x128xf32, #tpu.memory_space<vmem>>, %arg4: memref<128x128xf32, #tpu.memory_space<vmem>>, %arg5: memref<1x128xf32, #tpu.memory_space<vmem>>, %arg6: memref<8x128xf32, #tpu.memory_space<vmem>>) attributes {dimension_semantics = [#tpu.dimension_semantics<parallel>, #tpu.dimension_semantics<parallel>, #tpu.dimension_semantics<arbitrary>], iteration_bounds = array<i64: 1, 1, 1>, scalar_prefetch = 0 : i64, scratch_operands = 0 : i64, tpu.core_type = #tpu.core_type<tc>, window_params = [{transform_indices = @transform_0, window_bounds = array<i64: 8, 128>}, {transform_indices = @transform_1, window_bounds = array<i64: 128, 128>}, {transform_indices = @transform_2, window_bounds = array<i64: 1, 128>}, {transform_indices = @transform_3, window_bounds = array<i64: 8, 128>}]} {
    %c0_i32 = arith.constant 0 : i32
    %0 = arith.cmpi eq, %arg2, %c0_i32 : i32
    %1 = arith.extui %0 : i1 to i32
    %c0_i32_0 = arith.constant 0 : i32
    %2 = arith.cmpi ne, %1, %c0_i32_0 : i32
    scf.if %2 {
      %c0_8 = arith.constant 0 : index
      %c0_9 = arith.constant 0 : index
      %9 = vector.load %arg5[%c0_8, %c0_9] : memref<1x128xf32, #tpu.memory_space<vmem>>, vector<1x128xf32>
      %10 = vector.shape_cast %9 : vector<1x128xf32> to vector<1x128xf32>
      %11 = vector.broadcast %10 : vector<1x128xf32> to vector<8x128xf32>
      %c0_10 = arith.constant 0 : index
      %c0_11 = arith.constant 0 : index
      %12 = vector.load %arg6[%c0_10, %c0_11] : memref<8x128xf32, #tpu.memory_space<vmem>>, vector<8x128xf32>
      tpu.vector_store %arg6[%c0_10, %c0_11], %11 {strides = array<i32>} : memref<8x128xf32, #tpu.memory_space<vmem>>, vector<8x128xf32>,
    } else {
    }
    %c0 = arith.constant 0 : index
    %c0_1 = arith.constant 0 : index
    %3 = vector.load %arg3[%c0, %c0_1] : memref<8x128xf32, #tpu.memory_space<vmem>>, vector<8x128xf32>
    %c0_2 = arith.constant 0 : index
    %c0_3 = arith.constant 0 : index
    %4 = vector.load %arg4[%c0_2, %c0_3] : memref<128x128xf32, #tpu.memory_space<vmem>>, vector<128x128xf32>
    %c0_4 = arith.constant 0 : index
    %c0_5 = arith.constant 0 : index
    %5 = vector.load %arg6[%c0_4, %c0_5] : memref<8x128xf32, #tpu.memory_space<vmem>>, vector<8x128xf32>
    %cst = arith.constant dense<0.000000e+00> : vector<8x128xf32>
    %6 = tpu.matmul %3, %4, %cst {dimension_numbers = #tpu.dot_dimension_numbers<[1], [0], [0], [1], [0, 0, 1, 1], [], []>} : vector<8x128xf32>, vector<128x128xf32>, vector<8x128xf32> -> vector<8x128xf32>
    %7 = arith.addf %5, %6 : vector<8x128xf32>
    %c0_6 = arith.constant 0 : index
    %c0_7 = arith.constant 0 : index
    %8 = vector.load %arg6[%c0_6, %c0_7] : memref<8x128xf32, #tpu.memory_space<vmem>>, vector<8x128xf32>
    tpu.vector_store %arg6[%c0_6, %c0_7], %7 {strides = array<i32>} : memref<8x128xf32, #tpu.memory_space<vmem>>, vector<8x128xf32>,
    return
  }
  func.func @transform_0(%arg0: i32, %arg1: i32, %arg2: i32) -> (i32, i32) {
    %c0_i32 = arith.constant 0 : i32
    return %arg0, %arg2 : i32, i32
  }
  func.func @transform_1(%arg0: i32, %arg1: i32, %arg2: i32) -> (i32, i32) {
    %c0_i32 = arith.constant 0 : i32
    return %arg2, %arg1 : i32, i32
  }
  func.func @transform_2(%arg0: i32, %arg1: i32, %arg2: i32) -> (i32, i32) {
    %c0_i32 = arith.constant 0 : i32
    %c0_i32_0 = arith.constant 0 : i32
    return %c0_i32, %arg1 : i32, i32
  }
  func.func @transform_3(%arg0: i32, %arg1: i32, %arg2: i32) -> (i32, i32) {
    %c0_i32 = arith.constant 0 : i32
    return %arg0, %arg1 : i32, i32
  }
}

</mosaic_0001>

<llo_original>
// kernel: lr_forward.1
$region0: #{lr_forward.1}
  #allocation0 [shape = 'u32[]', space=smem, size = 0x4, offset = 0x4, fixed_abs, tag = 'smem constant byte address 0x4 - core index']
  #allocation1 [shape = 'u32[144,128]{1,0:T(1,128)}', space=vmem, size = 0x12000, scoped, tag = 'internal scratch']
  %s0 = inlined_call_operand.vmem [shape: f32[8,128], index: 0, kind: input, shape index: {}]
  %s1 = inlined_call_operand.hbm [shape: f32[128,128], index: 1, kind: input, shape index: {}]
  %s2 = inlined_call_operand.vmem [shape: f32[1,128], index: 2, kind: input, shape index: {}]
  %s3 = inlined_call_operand.hbm [shape: f32[8,128], index: 3, kind: output, shape index: {}]
  %s4 = sld [smem:[#allocation0]]
  $region30: #{lr_forward.1} parent=0
    _
  %s6 = ssub.s32 1, %s4
  %s7 = scalar_select 0, %s6, %s4
  $region1: #{lr_forward.1} parent=0
    #allocation2 [shape = 'u8[65536]{0}', space=vmem, size = 0x10000, scoped, tag = 'input window, operand 1, single buffered']
    #allocation3 [shape = 's32[1]{0}', space=sflag, size = 0x4, scoped, tag = 'scoped memory for lr_forward.1']
    #allocation4 [shape = 's32[1]{0}', space=sflag, size = 0x4, scoped, tag = 'scoped memory for lr_forward.1']
    #allocation5 [shape = 'u8[4096]{0}', space=vmem, size = 0x1000, scoped, tag = 'output window, operand 0, single buffered']
    %8 = vsyncpa [#allocation3], 0
    %9 = vsyncpa [#allocation4], 0
    // Predicated region
    $region2: #{lr_forward.1} parent=1 // pred_check
      _
    $region3: #{lr_forward.1} parent=1 // pred_check_branch
      %11 = sbr.rel (0) target = $region5
    $region4: #{lr_forward.1} parent=1 // pred_region
      _
    $region5: #{lr_forward.1} parent=1 // pred_fallthru
      _
    // Predicated region
    $region6: #{lr_forward.1} parent=1 // pred_check
      _
    $region7: #{lr_forward.1} parent=1 // pred_check_branch
      %13 = sbr.rel (0) target = $region9
    $region8: #{lr_forward.1} parent=1 // pred_region
      %s15 = ssub.s32 2048, 2048
      %16 = vsyncadd [#allocation3], %s15
      %s17 = sshll.u32 [#allocation2], 4
      %s18 = int_to_ptr.vmem [resolvable:$true] %s17
      %23 = dma.hbm_to_vmem [thread:$0]  %s1, 2048, %s18, [#allocation3], 128, 128, 8
    $region9: #{lr_forward.1} parent=1 // pred_fallthru
      _
    // Predicated region
    $region10: #{lr_forward.1} parent=1 // pred_check
      _
    $region11: #{lr_forward.1} parent=1 // pred_check_branch
      %25 = sbr.rel (0) target = $region13
    $region12: #{lr_forward.1} parent=1 // pred_region
      _
    $region13: #{lr_forward.1} parent=1 // pred_fallthru
      _
    // Predicated region
    $region14: #{lr_forward.1} parent=1 // pred_check
      _
    $region15: #{lr_forward.1} parent=1 // pred_check_branch
      %27 = sbr.rel (0) target = $region17
    $region16: #{lr_forward.1} parent=1 // pred_region
      %28 = dma.done [#allocation3], 2048
    $region17: #{lr_forward.1} parent=1 // pred_fallthru
      _
    %p29 = scmp.eq.s32.totalorder 0, 0
    // Predicated region
    $region18: #{lr_forward.1} parent=1 // pred_check
      %p30 = pneg %p29
    $region19: #{lr_forward.1} parent=1 // pred_check_branch
      %32 = sbr.rel (%p30) target = $region21
    $region20: #{lr_forward.1} parent=1 // pred_region
      %v33 = vld [vmem:[%s2] sm:$0x1]
      %v35 = vlaneseq
      %v36 = vshrl.u32 %v35, 7
      %v37 = vsub.s32 0, %v36
      %v38 = vrot.slane %v33, %v37
      %40 = vst [vmem:[#allocation5] sm:$0xff] %v38
    $region21: #{lr_forward.1} parent=1 // pred_fallthru
      _
    %v41 = vld [vmem:[%s0] sm:$0xff]
    %v42 = vld [vmem:[#allocation2] sm:$0xff]
    %v43 = vld [vmem:[#allocation2 + $0x8] sm:$0xff]
    %v44 = vld [vmem:[#allocation2 + $0x10] sm:$0xff]
    %v45 = vld [vmem:[#allocation2 + $0x18] sm:$0xff]
    %v46 = vld [vmem:[#allocation2 + $0x20] sm:$0xff]
    %v47 = vld [vmem:[#allocation2 + $0x28] sm:$0xff]
    %v48 = vld [vmem:[#allocation2 + $0x30] sm:$0xff]
    %v49 = vld [vmem:[#allocation2 + $0x38] sm:$0xff]
    %v50 = vld [vmem:[#allocation2 + $0x40] sm:$0xff]
    %v51 = vld [vmem:[#allocation2 + $0x48] sm:$0xff]
    %v52 = vld [vmem:[#allocation2 + $0x50] sm:$0xff]
    %v53 = vld [vmem:[#allocation2 + $0x58] sm:$0xff]
    %v54 = vld [vmem:[#allocation2 + $0x60] sm:$0xff]
    %v55 = vld [vmem:[#allocation2 + $0x68] sm:$0xff]
    %v56 = vld [vmem:[#allocation2 + $0x70] sm:$0xff]
    %v57 = vld [vmem:[#allocation2 + $0x78] sm:$0xff]
    %v58 = vld [vmem:[#allocation5] sm:$0xff]
    %59 = vmatprep.subr.mxu0 0.0
    %60 = vmatpush1.msra.mxu0 %v42
    %61 = vmatprep.subr.mxu0 0.0
    %62 = vmatpush1.msra.mxu0 %v43
    %63 = vmatprep.subr.mxu0 0.0
    %64 = vmatpush1.msra.mxu0 %v44
    %65 = vmatprep.subr.mxu0 0.0
    %66 = vmatpush1.msra.mxu0 %v45
    %67 = vmatprep.subr.mxu0 0.0
    %68 = vmatpush1.msra.mxu0 %v46
    %69 = vmatprep.subr.mxu0 0.0
    %70 = vmatpush1.msra.mxu0 %v47
    %71 = vmatprep.subr.mxu0 0.0
    %72 = vmatpush1.msra.mxu0 %v48
    %73 = vmatprep.subr.mxu0 0.0
    %74 = vmatpush1.msra.mxu0 %v49
    %75 = vmatprep.subr.mxu0 0.0
    %76 = vmatpush1.msra.mxu0 %v50
    %77 = vmatprep.subr.mxu0 0.0
    %78 = vmatpush1.msra.mxu0 %v51
    %79 = vmatprep.subr.mxu0 0.0
    %80 = vmatpush1.msra.mxu0 %v52
    %81 = vmatprep.subr.mxu0 0.0
    %82 = vmatpush1.msra.mxu0 %v53
    %83 = vmatprep.subr.mxu0 0.0
    %84 = vmatpush1.msra.mxu0 %v54
    %85 = vmatprep.subr.mxu0 0.0
    %86 = vmatpush1.msra.mxu0 %v55
    %87 = vmatprep.subr.mxu0 0.0
    %88 = vmatpush1.msra.mxu0 %v56
    %89 = vmatprep.subr.mxu0 0.0
    %90 = vmatpush1.msra.mxu0 %v57
    %91 = vmatprep.subr.mxu0 0.0
    %92 = vmatpush1.msra.mxu0 0.0
    %93 = vmatprep.subr.mxu0 0.0
    %94 = vmatpush1.msra.mxu0 0.0
    %95 = vmatprep.subr.mxu0 0.0
    %96 = vmatpush1.msra.mxu0 0.0
    %97 = vmatprep.subr.mxu0 0.0
    %98 = vmatpush1.msra.mxu0 0.0
    %99 = vmatprep.subr.mxu0 0.0
    %100 = vmatpush1.msra.mxu0 0.0
    %101 = vmatprep.subr.mxu0 0.0
    %102 = vmatpush1.msra.mxu0 0.0
    %103 = vmatprep.subr.mxu0 0.0
    %104 = vmatpush1.msra.mxu0 0.0
    %105 = vmatprep.subr.mxu0 0.0
    %106 = vmatpush1.msra.mxu0 0.0
    %107 = vmatprep.subr.mxu0 0.0
    %108 = vmatpush1.msra.mxu0 0.0
    %109 = vmatprep.subr.mxu0 0.0
    %110 = vmatpush1.msra.mxu0 0.0
    %111 = vmatprep.subr.mxu0 0.0
    %112 = vmatpush1.msra.mxu0 0.0
    %113 = vmatprep.subr.mxu0 0.0
    %114 = vmatpush1.msra.mxu0 0.0
    %115 = vmatprep.subr.mxu0 0.0
    %116 = vmatpush1.msra.mxu0 0.0
    %117 = vmatprep.subr.mxu0 0.0
    %118 = vmatpush1.msra.mxu0 0.0
    %119 = vmatprep.subr.mxu0 0.0
    %120 = vmatpush1.msra.mxu0 0.0
    %121 = vmatprep.subr.mxu0 0.0
    %122 = vmatpush1.msra.mxu0 0.0
    %123 = vmatprep.mubr.f32.mxu0 0.0
    %124 = vmatmul.mubr.f32.gmra.mrb[0].mxu0 %v41
    %v125 = vpop.f32.mrb[0].mxu0
    %v126 = vadd.f32 0.0, %v125
    %v127 = vpop.f32.mrb[0].mxu0
    %128 = vdwg.mxu0
    %v129 = vadd.f32 %v58, %v126
    %130 = vst [vmem:[#allocation5] sm:$0xff] %v129
    // Predicated region
    $region22: #{lr_forward.1} parent=1 // pred_check
      _
    $region23: #{lr_forward.1} parent=1 // pred_check_branch
      %132 = sbr.rel (0) target = $region25
    $region24: #{lr_forward.1} parent=1 // pred_region
      %s134 = ssub.s32 128, 128
      %135 = vsyncadd [#allocation4], %s134
      %s137 = sshll.u32 [#allocation5], 4
      %s138 = int_to_ptr.vmem [resolvable:$true] %s137
      %140 = dma.vmem_to_hbm [thread:$0]  %s138, 128, %s3, [#allocation4]
    $region25: #{lr_forward.1} parent=1 // pred_fallthru
      _
    // Predicated region
    $region26: #{lr_forward.1} parent=1 // pred_check
      _
    $region27: #{lr_forward.1} parent=1 // pred_check_branch
      %142 = sbr.rel (0) target = $region29
    $region28: #{lr_forward.1} parent=1 // pred_region
      %143 = dma.done [#allocation4], 128
    $region29: #{lr_forward.1} parent=1 // pred_fallthru
      _
    %144 = vsyncpa [#allocation3], 1
    %145 = vsyncpa [#allocation4], 1

</llo_original>
